<compile_context>
chip_gen: v5e
topology: v5e:2x2
jax: 0.10.0
libtpu: 0.0.40
codegen_flags: <defaults>
</compile_context>

<pallas_src>
import functools

import jax
import jax.numpy as jnp
from jax.experimental import pallas as pl
from jax.experimental.pallas import tpu as pltpu

LANE = 128


def _round_up(x, m):
    return ((x + m - 1) // m) * m


def _rollout_kernel(state0_ref, actions_ref,
                    w1s_ref, w1a_ref, b1_ref,
                    w2_ref, b2_ref,
                    w3_ref, b3_ref,
                    wa_ref, ba_ref,
                    state_ref, aux_ref):
    # state_ref is the VMEM-resident carried embedding state: its output block
    # index is constant across the sequential ("arbitrary") grid axis, so it
    # behaves as an accumulator that persists across timesteps.
    @pl.when(pl.program_id(0) == 0)
    def _():
        state_ref[...] = state0_ref[...]

    s = state_ref[...]          # (B, Ep)  carried embedding state
    a = actions_ref[0]          # (B, A)   action for this timestep

    # Layer 1: fused concat + linear + ReLU (split-weight form, exact).
    h = jnp.dot(s, w1s_ref[...], preferred_element_type=jnp.float32)
    h = h + jnp.dot(a, w1a_ref[...], preferred_element_type=jnp.float32)
    h = jnp.maximum(h + b1_ref[...], 0.0)
    # Layer 2
    h = jnp.maximum(
        jnp.dot(h, w2_ref[...], preferred_element_type=jnp.float32) + b2_ref[...], 0.0)
    # Layer 3 -> new embedding state
    h = jnp.maximum(
        jnp.dot(h, w3_ref[...], preferred_element_type=jnp.float32) + b3_ref[...], 0.0)
    state_ref[...] = h

    # Auxiliary head (no activation), lane-dense padded to 128 columns.
    aux_ref[0] = jnp.dot(h, wa_ref[...], preferred_element_type=jnp.float32) + ba_ref[...]


@functools.partial(jax.jit, static_argnames=("embedding_size", "out_features"))
def dynamics_rollout(state, actions, padded_params, *, embedding_size, out_features):
    """Runs T dynamics steps in a single kernel launch.

    state:   (B, E)      initial embedding state
    actions: (T, B, A)   per-step actions
    Returns (final_state (B, E), aux (T, B, out_features)).
    """
    B, E = state.shape
    T, _, A = actions.shape
    Ep = padded_params["w1s"].shape[0]   # padded embedding width (lane-dense)
    Op = padded_params["wa"].shape[1]    # padded aux width (lane-dense)

    state0 = jnp.pad(state.astype(jnp.float32), ((0, 0), (0, Ep - E)))
    actions = actions.astype(jnp.float32)

    flops = 2 * T * B * (3 * Ep * Ep + A * Ep + Ep * Op)
    bytes_accessed = 4 * (
        3 * Ep * Ep + A * Ep + 3 * Ep + Ep * Op + Op     # weights + biases (read once)
        + B * Ep                                         # initial state
        + T * B * A                                      # actions
        + B * Ep + T * B * Op)                           # outputs

    def wspec(shape):
        return pl.BlockSpec(shape, lambda t: (0, 0))     # resident: fetched once

    new_state, aux = pl.pallas_call(
        _rollout_kernel,
        out_shape=(
            jax.ShapeDtypeStruct((B, Ep), jnp.float32),
            jax.ShapeDtypeStruct((T, B, Op), jnp.float32),
        ),
        grid_spec=pltpu.PrefetchScalarGridSpec(
            num_scalar_prefetch=0,
            grid=(T,),
            in_specs=[
                pl.BlockSpec((B, Ep), lambda t: (0, 0)),        # initial state
                pl.BlockSpec((1, B, A), lambda t: (t, 0, 0)),   # per-step actions
                wspec((Ep, Ep)), wspec((A, Ep)), wspec((1, Ep)),   # layer 1
                wspec((Ep, Ep)), wspec((1, Ep)),                   # layer 2
                wspec((Ep, Ep)), wspec((1, Ep)),                   # layer 3
                wspec((Ep, Op)), wspec((1, Op)),                   # aux head
            ],
            out_specs=(
                pl.BlockSpec((B, Ep), lambda t: (0, 0)),        # carried state
                pl.BlockSpec((1, B, Op), lambda t: (t, 0, 0)),  # per-step aux
            ),
        ),
        compiler_params=pltpu.CompilerParams(
            dimension_semantics=("arbitrary",)),                # sequential carry
        cost_estimate=pl.CostEstimate(
            flops=flops, transcendentals=0, bytes_accessed=bytes_accessed),
    )(
        state0, actions,
        padded_params["w1s"], padded_params["w1a"], padded_params["b1"],
        padded_params["w2"], padded_params["b2"],
        padded_params["w3"], padded_params["b3"],
        padded_params["wa"], padded_params["ba"],
    )
    return new_state[:, :embedding_size], aux[:, :, :out_features]


def dynamics_forward(state, action, padded_params, *, embedding_size, out_features):
    """Single-step forward (PyTorch module semantics): returns (new_state, aux)."""
    new_state, aux = dynamics_rollout(
        state, action[None], padded_params,
        embedding_size=embedding_size, out_features=out_features)
    return new_state, aux[0]


def init_params(key, embedding_size, action_dim, out_features):
    """Deterministic PyTorch-Linear-style init (uniform +-1/sqrt(fan_in)).
    Weights are stored as (in_features, out_features) (i.e. already W.T)."""
    E, A = embedding_size, action_dim
    in_dim = E + A
    ks = jax.random.split(key, 8)

    def u(k, shape, fan_in):
        bound = 1.0 / jnp.sqrt(fan_in)
        return jax.random.uniform(k, shape, jnp.float32, -bound, bound)

    w1 = u(ks[0], (in_dim, E), in_dim)
    return {
        "w1s": w1[:E, :],                    # state rows of W1
        "w1a": w1[E:, :],                    # action rows of W1
        "b1": u(ks[1], (1, E), in_dim),
        "w2": u(ks[2], (E, E), E),
        "b2": u(ks[3], (1, E), E),
        "w3": u(ks[4], (E, E), E),
        "b3": u(ks[5], (1, E), E),
        "wa": u(ks[6], (E, out_features), E),
        "ba": u(ks[7], (1, out_features), E),
    }


def pad_params(p, embedding_size, action_dim, out_features):
    """Zero-pad feature dims to lane-dense (128-multiple) widths. Exact."""
    E, A, O = embedding_size, action_dim, out_features
    Ep = _round_up(max(E, LANE), LANE)
    Op = _round_up(max(O, LANE), LANE)

    def pad2(x, rows, cols):
        return jnp.pad(x, ((0, rows - x.shape[0]), (0, cols - x.shape[1])))

    return {
        "w1s": pad2(p["w1s"], Ep, Ep),
        "w1a": pad2(p["w1a"], A, Ep),
        "b1": pad2(p["b1"], 1, Ep),
        "w2": pad2(p["w2"], Ep, Ep),
        "b2": pad2(p["b2"], 1, Ep),
        "w3": pad2(p["w3"], Ep, Ep),
        "b3": pad2(p["b3"], 1, Ep),
        "wa": pad2(p["wa"], Ep, Op),
        "ba": pad2(p["ba"], 1, Op),
    }


def _reference_rollout(state, actions, p):
    w1 = jnp.concatenate([p["w1s"], p["w1a"]], axis=0)

    def step(s, a):
        x = jnp.concatenate([s, a], axis=-1)
        h = jax.nn.relu(x @ w1 + p["b1"])
        h = jax.nn.relu(h @ p["w2"] + p["b2"])
        h = jax.nn.relu(h @ p["w3"] + p["b3"])
        return h, h @ p["wa"] + p["ba"]

    aux_list = []
    s = state
    for t in range(actions.shape[0]):
        s, aux = step(s, actions[t])
        aux_list.append(aux)
    return s, jnp.stack(aux_list, axis=0)


if __name__ == "__main__":
    B = 8       # batch (number of walkers)
    E = 32      # embedding_size
    A = 4       # np.prod(action_shape) for a Box(4,) action space
    OUT = 1     # out_features
    T = 6       # rollout length amortized into a single kernel launch

    key = jax.random.PRNGKey(0)
    k_params, k_state, k_action = jax.random.split(key, 3)

    params = init_params(k_params, E, A, OUT)
    padded = pad_params(params, E, A, OUT)

    state = jax.random.normal(k_state, (B, E), jnp.float32)
    actions = jax.random.normal(k_action, (T, B, A), jnp.float32)

    # Multi-step rollout in one launch (weights stay VMEM-resident).
    new_state, aux = dynamics_rollout(state, actions, padded,
                                      embedding_size=E, out_features=OUT)
    jax.block_until_ready((new_state, aux))

    ref_state, ref_aux = _reference_rollout(state, actions, params)
    assert new_state.shape == (B, E) and aux.shape == (T, B, OUT)
    assert jnp.allclose(new_state, ref_state, atol=1e-4, rtol=1e-4), \
        float(jnp.max(jnp.abs(new_state - ref_state)))
    assert jnp.allclose(aux, ref_aux, atol=1e-4, rtol=1e-4), \
        float(jnp.max(jnp.abs(aux - ref_aux)))

    # Single-step path (exact PyTorch forward() semantics).
    ns1, aux1 = dynamics_forward(state, actions[0], padded,
                                 embedding_size=E, out_features=OUT)
    jax.block_until_ready((ns1, aux1))
    r_ns1, r_aux1 = _reference_rollout(state, actions[:1], params)
    assert jnp.allclose(ns1, r_ns1, atol=1e-4, rtol=1e-4)
    assert jnp.allclose(aux1, r_aux1[0], atol=1e-4, rtol=1e-4)

    print("KERNEL_OK")
</pallas_src>

<mosaic_0001>
module attributes {stable_mosaic.version = 11 : i64} {
  func.func @_rollout_kernel(%arg0: i32, %arg1: memref<8x128xf32, #tpu.memory_space<vmem>>, %arg2: memref<1x8x4xf32, #tpu.memory_space<vmem>>, %arg3: memref<128x128xf32, #tpu.memory_space<vmem>>, %arg4: memref<4x128xf32, #tpu.memory_space<vmem>>, %arg5: memref<1x128xf32, #tpu.memory_space<vmem>>, %arg6: memref<128x128xf32, #tpu.memory_space<vmem>>, %arg7: memref<1x128xf32, #tpu.memory_space<vmem>>, %arg8: memref<128x128xf32, #tpu.memory_space<vmem>>, %arg9: memref<1x128xf32, #tpu.memory_space<vmem>>, %arg10: memref<128x128xf32, #tpu.memory_space<vmem>>, %arg11: memref<1x128xf32, #tpu.memory_space<vmem>>, %arg12: memref<8x128xf32, #tpu.memory_space<vmem>>, %arg13: memref<1x8x128xf32, #tpu.memory_space<vmem>>) attributes {dimension_semantics = [#tpu.dimension_semantics<arbitrary>], iteration_bounds = array<i64: 6>, scalar_prefetch = 0 : i64, scratch_operands = 0 : i64, tpu.core_type = #tpu.core_type<tc>, window_params = [{pipeline_mode = #tpu.pipeline_mode<synchronous>, transform_indices = @transform_0, window_bounds = array<i64: 8, 128>}, {transform_indices = @transform_1, window_bounds = array<i64: 1, 8, 4>}, {pipeline_mode = #tpu.pipeline_mode<synchronous>, transform_indices = @transform_2, window_bounds = array<i64: 128, 128>}, {pipeline_mode = #tpu.pipeline_mode<synchronous>, transform_indices = @transform_3, window_bounds = array<i64: 4, 128>}, {pipeline_mode = #tpu.pipeline_mode<synchronous>, transform_indices = @transform_4, window_bounds = array<i64: 1, 128>}, {pipeline_mode = #tpu.pipeline_mode<synchronous>, transform_indices = @transform_5, window_bounds = array<i64: 128, 128>}, {pipeline_mode = #tpu.pipeline_mode<synchronous>, transform_indices = @transform_6, window_bounds = array<i64: 1, 128>}, {pipeline_mode = #tpu.pipeline_mode<synchronous>, transform_indices = @transform_7, window_bounds = array<i64: 128, 128>}, {pipeline_mode = #tpu.pipeline_mode<synchronous>, transform_indices = @transform_8, window_bounds = array<i64: 1, 128>}, {pipeline_mode = #tpu.pipeline_mode<synchronous>, transform_indices = @transform_9, window_bounds = array<i64: 128, 128>}, {pipeline_mode = #tpu.pipeline_mode<synchronous>, transform_indices = @transform_10, window_bounds = array<i64: 1, 128>}, {pipeline_mode = #tpu.pipeline_mode<synchronous>, transform_indices = @transform_11, window_bounds = array<i64: 8, 128>}, {transform_indices = @transform_12, window_bounds = array<i64: 1, 8, 128>}]} {
    %c0_i32 = arith.constant 0 : i32
    %0 = arith.cmpi eq, %arg0, %c0_i32 : i32
    %1 = arith.extui %0 : i1 to i32
    %c0_i32_0 = arith.constant 0 : i32
    %2 = arith.cmpi ne, %1, %c0_i32_0 : i32
    scf.if %2 {
      %c0_35 = arith.constant 0 : index
      %c0_36 = arith.constant 0 : index
      %39 = vector.load %arg1[%c0_35, %c0_36] : memref<8x128xf32, #tpu.memory_space<vmem>>, vector<8x128xf32>
      %c0_37 = arith.constant 0 : index
      %c0_38 = arith.constant 0 : index
      %40 = vector.load %arg12[%c0_37, %c0_38] : memref<8x128xf32, #tpu.memory_space<vmem>>, vector<8x128xf32>
      tpu.vector_store %arg12[%c0_37, %c0_38], %39 {strides = array<i32>} : memref<8x128xf32, #tpu.memory_space<vmem>>, vector<8x128xf32>,
    } else {
    }
    %c0 = arith.constant 0 : index
    %c0_1 = arith.constant 0 : index
    %3 = vector.load %arg12[%c0, %c0_1] : memref<8x128xf32, #tpu.memory_space<vmem>>, vector<8x128xf32>
    %c0_2 = arith.constant 0 : index
    %c0_3 = arith.constant 0 : index
    %c0_4 = arith.constant 0 : index
    %4 = vector.load %arg2[%c0_2, %c0_3, %c0_4] : memref<1x8x4xf32, #tpu.memory_space<vmem>>, vector<1x8x4xf32>
    %5 = vector.shape_cast %4 : vector<1x8x4xf32> to vector<8x4xf32>
    %c0_5 = arith.constant 0 : index
    %c0_6 = arith.constant 0 : index
    %6 = vector.load %arg3[%c0_5, %c0_6] : memref<128x128xf32, #tpu.memory_space<vmem>>, vector<128x128xf32>
    %cst = arith.constant dense<0.000000e+00> : vector<8x128xf32>
    %7 = tpu.matmul %3, %6, %cst {dimension_numbers = #tpu.dot_dimension_numbers<[1], [0], [0], [1], [0, 0, 1, 1], [], []>} : vector<8x128xf32>, vector<128x128xf32>, vector<8x128xf32> -> vector<8x128xf32>
    %c0_7 = arith.constant 0 : index
    %c0_8 = arith.constant 0 : index
    %8 = vector.load %arg4[%c0_7, %c0_8] : memref<4x128xf32, #tpu.memory_space<vmem>>, vector<4x128xf32>
    %cst_9 = arith.constant dense<0.000000e+00> : vector<8x128xf32>
    %9 = tpu.matmul %5, %8, %cst_9 {dimension_numbers = #tpu.dot_dimension_numbers<[1], [0], [0], [1], [0, 0, 1, 1], [], []>} : vector<8x4xf32>, vector<4x128xf32>, vector<8x128xf32> -> vector<8x128xf32>
    %10 = arith.addf %7, %9 : vector<8x128xf32>
    %c0_10 = arith.constant 0 : index
    %c0_11 = arith.constant 0 : index
    %11 = vector.load %arg5[%c0_10, %c0_11] : memref<1x128xf32, #tpu.memory_space<vmem>>, vector<1x128xf32>
    %12 = vector.broadcast %11 : vector<1x128xf32> to vector<8x128xf32>
    %13 = arith.addf %10, %12 : vector<8x128xf32>
    %cst_12 = arith.constant 0.000000e+00 : f32
    %14 = vector.broadcast %cst_12 : f32 to vector<8x128xf32>
    %15 = arith.maximumf %13, %14 : vector<8x128xf32>
    %c0_13 = arith.constant 0 : index
    %c0_14 = arith.constant 0 : index
    %16 = vector.load %arg6[%c0_13, %c0_14] : memref<128x128xf32, #tpu.memory_space<vmem>>, vector<128x128xf32>
    %cst_15 = arith.constant dense<0.000000e+00> : vector<8x128xf32>
    %17 = tpu.matmul %15, %16, %cst_15 {dimension_numbers = #tpu.dot_dimension_numbers<[1], [0], [0], [1], [0, 0, 1, 1], [], []>} : vector<8x128xf32>, vector<128x128xf32>, vector<8x128xf32> -> vector<8x128xf32>
    %c0_16 = arith.constant 0 : index
    %c0_17 = arith.constant 0 : index
    %18 = vector.load %arg7[%c0_16, %c0_17] : memref<1x128xf32, #tpu.memory_space<vmem>>, vector<1x128xf32>
    %19 = vector.broadcast %18 : vector<1x128xf32> to vector<8x128xf32>
    %20 = arith.addf %17, %19 : vector<8x128xf32>
    %cst_18 = arith.constant 0.000000e+00 : f32
    %21 = vector.broadcast %cst_18 : f32 to vector<8x128xf32>
    %22 = arith.maximumf %20, %21 : vector<8x128xf32>
    %c0_19 = arith.constant 0 : index
    %c0_20 = arith.constant 0 : index
    %23 = vector.load %arg8[%c0_19, %c0_20] : memref<128x128xf32, #tpu.memory_space<vmem>>, vector<128x128xf32>
    %cst_21 = arith.constant dense<0.000000e+00> : vector<8x128xf32>
    %24 = tpu.matmul %22, %23, %cst_21 {dimension_numbers = #tpu.dot_dimension_numbers<[1], [0], [0], [1], [0, 0, 1, 1], [], []>} : vector<8x128xf32>, vector<128x128xf32>, vector<8x128xf32> -> vector<8x128xf32>
    %c0_22 = arith.constant 0 : index
    %c0_23 = arith.constant 0 : index
    %25 = vector.load %arg9[%c0_22, %c0_23] : memref<1x128xf32, #tpu.memory_space<vmem>>, vector<1x128xf32>
    %26 = vector.broadcast %25 : vector<1x128xf32> to vector<8x128xf32>
    %27 = arith.addf %24, %26 : vector<8x128xf32>
    %cst_24 = arith.constant 0.000000e+00 : f32
    %28 = vector.broadcast %cst_24 : f32 to vector<8x128xf32>
    %29 = arith.maximumf %27, %28 : vector<8x128xf32>
    %c0_25 = arith.constant 0 : index
    %c0_26 = arith.constant 0 : index
    %30 = vector.load %arg12[%c0_25, %c0_26] : memref<8x128xf32, #tpu.memory_space<vmem>>, vector<8x128xf32>
    tpu.vector_store %arg12[%c0_25, %c0_26], %29 {strides = array<i32>} : memref<8x128xf32, #tpu.memory_space<vmem>>, vector<8x128xf32>,
    %c0_27 = arith.constant 0 : index
    %c0_28 = arith.constant 0 : index
    %31 = vector.load %arg10[%c0_27, %c0_28] : memref<128x128xf32, #tpu.memory_space<vmem>>, vector<128x128xf32>
    %cst_29 = arith.constant dense<0.000000e+00> : vector<8x128xf32>
    %32 = tpu.matmul %29, %31, %cst_29 {dimension_numbers = #tpu.dot_dimension_numbers<[1], [0], [0], [1], [0, 0, 1, 1], [], []>} : vector<8x128xf32>, vector<128x128xf32>, vector<8x128xf32> -> vector<8x128xf32>
    %c0_30 = arith.constant 0 : index
    %c0_31 = arith.constant 0 : index
    %33 = vector.load %arg11[%c0_30, %c0_31] : memref<1x128xf32, #tpu.memory_space<vmem>>, vector<1x128xf32>
    %34 = vector.broadcast %33 : vector<1x128xf32> to vector<8x128xf32>
    %35 = arith.addf %32, %34 : vector<8x128xf32>
    %c0_32 = arith.constant 0 : index
    %c0_33 = arith.constant 0 : index
    %c0_34 = arith.constant 0 : index
    %36 = vector.load %arg13[%c0_32, %c0_33, %c0_34] : memref<1x8x128xf32, #tpu.memory_space<vmem>>, vector<1x8x128xf32>
    %37 = vector.shape_cast %36 : vector<1x8x128xf32> to vector<8x128xf32>
    %38 = vector.shape_cast %35 : vector<8x128xf32> to vector<1x8x128xf32>
    tpu.vector_store %arg13[%c0_32, %c0_33, %c0_34], %38 {strides = array<i32>} : memref<1x8x128xf32, #tpu.memory_space<vmem>>, vector<1x8x128xf32>,
    return
  }
  func.func @transform_0(%arg0: i32) -> (i32, i32) {
    %c0_i32 = arith.constant 0 : i32
    %c0_i32_0 = arith.constant 0 : i32
    %c0_i32_1 = arith.constant 0 : i32
    return %c0_i32, %c0_i32_0 : i32, i32
  }
  func.func @transform_1(%arg0: i32) -> (i32, i32, i32) {
    %c0_i32 = arith.constant 0 : i32
    %c0_i32_0 = arith.constant 0 : i32
    %c0_i32_1 = arith.constant 0 : i32
    return %arg0, %c0_i32, %c0_i32_0 : i32, i32, i32
  }
  func.func @transform_2(%arg0: i32) -> (i32, i32) {
    %c0_i32 = arith.constant 0 : i32
    %c0_i32_0 = arith.constant 0 : i32
    %c0_i32_1 = arith.constant 0 : i32
    return %c0_i32, %c0_i32_0 : i32, i32
  }
  func.func @transform_3(%arg0: i32) -> (i32, i32) {
    %c0_i32 = arith.constant 0 : i32
    %c0_i32_0 = arith.constant 0 : i32
    %c0_i32_1 = arith.constant 0 : i32
    return %c0_i32, %c0_i32_0 : i32, i32
  }
  func.func @transform_4(%arg0: i32) -> (i32, i32) {
    %c0_i32 = arith.constant 0 : i32
    %c0_i32_0 = arith.constant 0 : i32
    %c0_i32_1 = arith.constant 0 : i32
    return %c0_i32, %c0_i32_0 : i32, i32
  }
  func.func @transform_5(%arg0: i32) -> (i32, i32) {
    %c0_i32 = arith.constant 0 : i32
    %c0_i32_0 = arith.constant 0 : i32
    %c0_i32_1 = arith.constant 0 : i32
    return %c0_i32, %c0_i32_0 : i32, i32
  }
  func.func @transform_6(%arg0: i32) -> (i32, i32) {
    %c0_i32 = arith.constant 0 : i32
    %c0_i32_0 = arith.constant 0 : i32
    %c0_i32_1 = arith.constant 0 : i32
    return %c0_i32, %c0_i32_0 : i32, i32
  }
  func.func @transform_7(%arg0: i32) -> (i32, i32) {
    %c0_i32 = arith.constant 0 : i32
    %c0_i32_0 = arith.constant 0 : i32
    %c0_i32_1 = arith.constant 0 : i32
    return %c0_i32, %c0_i32_0 : i32, i32
  }
  func.func @transform_8(%arg0: i32) -> (i32, i32) {
    %c0_i32 = arith.constant 0 : i32
    %c0_i32_0 = arith.constant 0 : i32
    %c0_i32_1 = arith.constant 0 : i32
    return %c0_i32, %c0_i32_0 : i32, i32
  }
  func.func @transform_9(%arg0: i32) -> (i32, i32) {
    %c0_i32 = arith.constant 0 : i32
    %c0_i32_0 = arith.constant 0 : i32
    %c0_i32_1 = arith.constant 0 : i32
    return %c0_i32, %c0_i32_0 : i32, i32
  }
  func.func @transform_10(%arg0: i32) -> (i32, i32) {
    %c0_i32 = arith.constant 0 : i32
    %c0_i32_0 = arith.constant 0 : i32
    %c0_i32_1 = arith.constant 0 : i32
    return %c0_i32, %c0_i32_0 : i32, i32
  }
  func.func @transform_11(%arg0: i32) -> (i32, i32) {
    %c0_i32 = arith.constant 0 : i32
    %c0_i32_0 = arith.constant 0 : i32
    %c0_i32_1 = arith.constant 0 : i32
    return %c0_i32, %c0_i32_0 : i32, i32
  }
  func.func @transform_12(%arg0: i32) -> (i32, i32, i32) {
    %c0_i32 = arith.constant 0 : i32
    %c0_i32_0 = arith.constant 0 : i32
    %c0_i32_1 = arith.constant 0 : i32
    return %arg0, %c0_i32, %c0_i32_0 : i32, i32, i32
  }
}

</mosaic_0001>

<llo_original>
// kernel: dynamics_rollout.1
$region0: #{dynamics_rollout.1}
  #allocation0 [shape = 'u32[]', space=smem, size = 0x4, offset = 0x4, fixed_abs, tag = 'smem constant byte address 0x4 - core index']
  #allocation1 [shape = 'u32[72,128]{1,0:T(1,128)}', space=vmem, size = 0x9000, scoped, tag = 'internal scratch']
  %s0 = inlined_call_operand.vmem [shape: f32[8,128], index: 0, kind: input, shape index: {}]
  %s1 = inlined_call_operand.vmem [shape: f32[6,8,4], index: 1, kind: input, shape index: {}]
  %s2 = inlined_call_operand.hbm [shape: f32[128,128], index: 2, kind: input, shape index: {}]
  %s3 = inlined_call_operand.vmem [shape: f32[4,128], index: 3, kind: input, shape index: {}]
  %s4 = inlined_call_operand.vmem [shape: f32[1,128], index: 4, kind: input, shape index: {}]
  %s5 = inlined_call_operand.hbm [shape: f32[128,128], index: 5, kind: input, shape index: {}]
  %s6 = inlined_call_operand.vmem [shape: f32[1,128], index: 6, kind: input, shape index: {}]
  %s7 = inlined_call_operand.hbm [shape: f32[128,128], index: 7, kind: input, shape index: {}]
  %s8 = inlined_call_operand.vmem [shape: f32[1,128], index: 8, kind: input, shape index: {}]
  %s9 = inlined_call_operand.hbm [shape: f32[128,128], index: 9, kind: input, shape index: {}]
  %s10 = inlined_call_operand.vmem [shape: f32[1,128], index: 10, kind: input, shape index: {}]
  %s11 = inlined_call_operand.hbm [shape: f32[8,128], index: 11, kind: output, shape index: {0}]
  %s12 = inlined_call_operand.vmem [shape: f32[6,8,128], index: 12, kind: output, shape index: {1}]
  %13 = xla_tuple %s11, %s12
  %s14 = sld [smem:[#allocation0]]
  $region105: #{dynamics_rollout.1} parent=0
    _
  %s16 = ssub.s32 1, %s14
  %s17 = scalar_select 0, %s16, %s14
  $region1: #{dynamics_rollout.1} parent=0
    #allocation2 [shape = 'u8[65536]{0}', space=vmem, size = 0x10000, scoped, tag = 'input window, operand 2, single buffered']
    #allocation3 [shape = 's32[2]{0}', space=sflag, size = 0x8, scoped, tag = 'scoped memory for dynamics_rollout.1']
    #allocation4 [shape = 's32[2]{0}', space=sflag, size = 0x8, scoped, tag = 'scoped memory for dynamics_rollout.1']
    #allocation5 [shape = 'u8[65536]{0}', space=vmem, size = 0x10000, scoped, tag = 'input window, operand 5, single buffered']
    #allocation6 [shape = 's32[1]{0}', space=sflag, size = 0x4, scoped, tag = 'scoped memory for dynamics_rollout.1']
    #allocation7 [shape = 'u8[65536]{0}', space=vmem, size = 0x10000, scoped, tag = 'input window, operand 7, single buffered']
    #allocation8 [shape = 'u8[65536]{0}', space=vmem, size = 0x10000, scoped, tag = 'input window, operand 9, single buffered']
    #allocation9 [shape = 's32[1]{0}', space=sflag, size = 0x4, scoped, tag = 'scoped memory for dynamics_rollout.1']
    #allocation10 [shape = 'u8[4096]{0}', space=vmem, size = 0x1000, scoped, tag = 'output window, operand 0, single buffered']
    %18 = vsyncpa [#allocation3], 0
    %19 = vsyncpa [#allocation6], 0
    %20 = vsyncpa [#allocation9], 0
    %21 = vsyncpa [#allocation4], 0
    loop: start=0, step=1, limit=8
    $region2: #{dynamics_rollout.1} parent=1 // loop_pre_header
      _
    $region3: #{dynamics_rollout.1} parent=1 // loop_header
      %s23 = sphi 0, %s27
      %p24 = scmp.ge.s32.totalorder %s23, 8
      %s31 = sphi 0, %s31
      %s33 = sphi 0, %s31
      %s34 = sphi 0, %s33
      %s48 = sphi 0, %s34
      %s54 = sphi 0, %s56
      %s57 = sphi 0, %s54
      %s58 = sphi 0, %s57
      %s74 = sphi 0, %s58
      %s78 = sphi 0, %s78
      %s80 = sphi 0, %s78
      %s81 = sphi 0, %s80
      %s95 = sphi 0, %s81
      %s99 = sphi 0, %s99
      %s101 = sphi 0, %s99
      %s102 = sphi 0, %s101
      %s116 = sphi 0, %s102
      %s120 = sphi 0, %s120
      %s122 = sphi 0, %s120
      %s123 = sphi 0, %s122
      %s137 = sphi 0, %s123
      %s141 = sphi 0, %s141
      %s143 = sphi 0, %s141
      %s144 = sphi 0, %s143
      %s158 = sphi 0, %s144
      %s162 = sphi 0, %s162
      %s164 = sphi 0, %s162
      %s165 = sphi 0, %s164
      %s179 = sphi 0, %s165
      %s183 = sphi 0, %s183
      %s185 = sphi 0, %s183
      %s186 = sphi 0, %s185
      %s200 = sphi 0, %s186
      %s204 = sphi 0, %s204
      %s206 = sphi 0, %s204
      %s207 = sphi 0, %s206
      %s221 = sphi 0, %s207
      %s225 = sphi 0, %s225
      %s227 = sphi 0, %s225
      %s228 = sphi 0, %s227
      %s242 = sphi 0, %s228
      %s246 = sphi 0, %s246
      %s248 = sphi 0, %s246
      %s249 = sphi 0, %s248
      %s263 = sphi 0, %s249
      %s267 = sphi 0, %s267
      %s269 = sphi 0, %s267
      %s270 = sphi 0, %s269
      %s284 = sphi 0, %s270
      %s290 = sphi 0, %s292
      %s293 = sphi 0, %s290
      %s294 = sphi 0, %s293
      %s310 = sphi 0, %s294
    $region4: #{dynamics_rollout.1} parent=1 // loop_header_branch
      %26 = sbr.rel (%p24) target = $region8
    $region5: #{dynamics_rollout.1} parent=1 // loop_body
      %s28 = ssub.s32 %s23, 1
      %s29 = ssub.s32 %s23, 2
      %s30 = sadd.s32 %s23, 1
      %s32 = sadd.s32 %s31, 1
      %p35 = scmp.eq.s32.totalorder %s23, 5
      %p36 = scmp.ne.s32.totalorder %s31, %s33
      %p37 = scmp.eq.s32.totalorder %s23, 0
      %p38 = por %p36, %p37
      %p39 = scmp.ne.s32.totalorder %s31, %s33
      %p40 = scmp.eq.s32.totalorder %s28, 5
      %p41 = por %p39, %p40
      %p42 = scmp.ne.s32.totalorder %s33, %s34
      %p43 = scmp.eq.s32.totalorder %s28, 0
      %p44 = por %p42, %p43
      %p45 = scmp.ne.s32.totalorder %s33, %s34
      %p46 = scmp.eq.s32.totalorder %s29, 5
      %p47 = por %p45, %p46
      %p49 = scmp.ne.s32.totalorder %s34, %s48
      %p50 = scmp.eq.s32.totalorder %s29, 0
      %p51 = por %p49, %p50
      %s52 = ssub.s32 %s23, %s30
      %p53 = scmp.eq.s32.totalorder %s52, 0
      %s55 = sadd.s32 %s54, 1
      %s56 = scalar_select %p53, %s54, %s55
      %p59 = pneg %p53
      %p60 = scmp.eq.s32.totalorder %s23, 5
      %p61 = por %p59, %p60
      %p62 = scmp.ne.s32.totalorder %s54, %s57
      %p63 = scmp.eq.s32.totalorder %s23, 0
      %p64 = por %p62, %p63
      %p65 = scmp.ne.s32.totalorder %s54, %s57
      %p66 = scmp.eq.s32.totalorder %s28, 5
      %p67 = por %p65, %p66
      %p68 = scmp.ne.s32.totalorder %s57, %s58
      %p69 = scmp.eq.s32.totalorder %s28, 0
      %p70 = por %p68, %p69
      %p71 = scmp.ne.s32.totalorder %s57, %s58
      %p72 = scmp.eq.s32.totalorder %s29, 5
      %p73 = por %p71, %p72
      %p75 = scmp.ne.s32.totalorder %s58, %s74
      %p76 = scmp.eq.s32.totalorder %s29, 0
      %p77 = por %p75, %p76
      %s79 = sadd.s32 %s78, 1
      %p82 = scmp.eq.s32.totalorder %s23, 5
      %p83 = scmp.ne.s32.totalorder %s78, %s80
      %p84 = scmp.eq.s32.totalorder %s23, 0
      %p85 = por %p83, %p84
      %p86 = scmp.ne.s32.totalorder %s78, %s80
      %p87 = scmp.eq.s32.totalorder %s28, 5
      %p88 = por %p86, %p87
      %p89 = scmp.ne.s32.totalorder %s80, %s81
      %p90 = scmp.eq.s32.totalorder %s28, 0
      %p91 = por %p89, %p90
      %p92 = scmp.ne.s32.totalorder %s80, %s81
      %p93 = scmp.eq.s32.totalorder %s29, 5
      %p94 = por %p92, %p93
      %p96 = scmp.ne.s32.totalorder %s81, %s95
      %p97 = scmp.eq.s32.totalorder %s29, 0
      %p98 = por %p96, %p97
      %s100 = sadd.s32 %s99, 1
      %p103 = scmp.eq.s32.totalorder %s23, 5
      %p104 = scmp.ne.s32.totalorder %s99, %s101
      %p105 = scmp.eq.s32.totalorder %s23, 0
      %p106 = por %p104, %p105
      %p107 = scmp.ne.s32.totalorder %s99, %s101
      %p108 = scmp.eq.s32.totalorder %s28, 5
      %p109 = por %p107, %p108
      %p110 = scmp.ne.s32.totalorder %s101, %s102
      %p111 = scmp.eq.s32.totalorder %s28, 0
      %p112 = por %p110, %p111
      %p113 = scmp.ne.s32.totalorder %s101, %s102
      %p114 = scmp.eq.s32.totalorder %s29, 5
      %p115 = por %p113, %p114
      %p117 = scmp.ne.s32.totalorder %s102, %s116
      %p118 = scmp.eq.s32.totalorder %s29, 0
      %p119 = por %p117, %p118
      %s121 = sadd.s32 %s120, 1
      %p124 = scmp.eq.s32.totalorder %s23, 5
      %p125 = scmp.ne.s32.totalorder %s120, %s122
      %p126 = scmp.eq.s32.totalorder %s23, 0
      %p127 = por %p125, %p126
      %p128 = scmp.ne.s32.totalorder %s120, %s122
      %p129 = scmp.eq.s32.totalorder %s28, 5
      %p130 = por %p128, %p129
      %p131 = scmp.ne.s32.totalorder %s122, %s123
      %p132 = scmp.eq.s32.totalorder %s28, 0
      %p133 = por %p131, %p132
      %p134 = scmp.ne.s32.totalorder %s122, %s123
      %p135 = scmp.eq.s32.totalorder %s29, 5
      %p136 = por %p134, %p135
      %p138 = scmp.ne.s32.totalorder %s123, %s137
      %p139 = scmp.eq.s32.totalorder %s29, 0
      %p140 = por %p138, %p139
      %s142 = sadd.s32 %s141, 1
      %p145 = scmp.eq.s32.totalorder %s23, 5
      %p146 = scmp.ne.s32.totalorder %s141, %s143
      %p147 = scmp.eq.s32.totalorder %s23, 0
      %p148 = por %p146, %p147
      %p149 = scmp.ne.s32.totalorder %s141, %s143
      %p150 = scmp.eq.s32.totalorder %s28, 5
      %p151 = por %p149, %p150
      %p152 = scmp.ne.s32.totalorder %s143, %s144
      %p153 = scmp.eq.s32.totalorder %s28, 0
      %p154 = por %p152, %p153
      %p155 = scmp.ne.s32.totalorder %s143, %s144
      %p156 = scmp.eq.s32.totalorder %s29, 5
      %p157 = por %p155, %p156
      %p159 = scmp.ne.s32.totalorder %s144, %s158
      %p160 = scmp.eq.s32.totalorder %s29, 0
      %p161 = por %p159, %p160
      %s163 = sadd.s32 %s162, 1
      %p166 = scmp.eq.s32.totalorder %s23, 5
      %p167 = scmp.ne.s32.totalorder %s162, %s164
      %p168 = scmp.eq.s32.totalorder %s23, 0
      %p169 = por %p167, %p168
      %p170 = scmp.ne.s32.totalorder %s162, %s164
      %p171 = scmp.eq.s32.totalorder %s28, 5
      %p172 = por %p170, %p171
      %p173 = scmp.ne.s32.totalorder %s164, %s165
      %p174 = scmp.eq.s32.totalorder %s28, 0
      %p175 = por %p173, %p174
      %p176 = scmp.ne.s32.totalorder %s164, %s165
      %p177 = scmp.eq.s32.totalorder %s29, 5
      %p178 = por %p176, %p177
      %p180 = scmp.ne.s32.totalorder %s165, %s179
      %p181 = scmp.eq.s32.totalorder %s29, 0
      %p182 = por %p180, %p181
      %s184 = sadd.s32 %s183, 1
      %p187 = scmp.eq.s32.totalorder %s23, 5
      %p188 = scmp.ne.s32.totalorder %s183, %s185
      %p189 = scmp.eq.s32.totalorder %s23, 0
      %p190 = por %p188, %p189
      %p191 = scmp.ne.s32.totalorder %s183, %s185
      %p192 = scmp.eq.s32.totalorder %s28, 5
      %p193 = por %p191, %p192
      %p194 = scmp.ne.s32.totalorder %s185, %s186
      %p195 = scmp.eq.s32.totalorder %s28, 0
      %p196 = por %p194, %p195
      %p197 = scmp.ne.s32.totalorder %s185, %s186
      %p198 = scmp.eq.s32.totalorder %s29, 5
      %p199 = por %p197, %p198
      %p201 = scmp.ne.s32.totalorder %s186, %s200
      %p202 = scmp.eq.s32.totalorder %s29, 0
      %p203 = por %p201, %p202
      %s205 = sadd.s32 %s204, 1
      %p208 = scmp.eq.s32.totalorder %s23, 5
      %p209 = scmp.ne.s32.totalorder %s204, %s206
      %p210 = scmp.eq.s32.totalorder %s23, 0
      %p211 = por %p209, %p210
      %p212 = scmp.ne.s32.totalorder %s204, %s206
      %p213 = scmp.eq.s32.totalorder %s28, 5
      %p214 = por %p212, %p213
      %p215 = scmp.ne.s32.totalorder %s206, %s207
      %p216 = scmp.eq.s32.totalorder %s28, 0
      %p217 = por %p215, %p216
      %p218 = scmp.ne.s32.totalorder %s206, %s207
      %p219 = scmp.eq.s32.totalorder %s29, 5
      %p220 = por %p218, %p219
      %p222 = scmp.ne.s32.totalorder %s207, %s221
      %p223 = scmp.eq.s32.totalorder %s29, 0
      %p224 = por %p222, %p223
      %s226 = sadd.s32 %s225, 1
      %p229 = scmp.eq.s32.totalorder %s23, 5
      %p230 = scmp.ne.s32.totalorder %s225, %s227
      %p231 = scmp.eq.s32.totalorder %s23, 0
      %p232 = por %p230, %p231
      %p233 = scmp.ne.s32.totalorder %s225, %s227
      %p234 = scmp.eq.s32.totalorder %s28, 5
      %p235 = por %p233, %p234
      %p236 = scmp.ne.s32.totalorder %s227, %s228
      %p237 = scmp.eq.s32.totalorder %s28, 0
      %p238 = por %p236, %p237
      %p239 = scmp.ne.s32.totalorder %s227, %s228
      %p240 = scmp.eq.s32.totalorder %s29, 5
      %p241 = por %p239, %p240
      %p243 = scmp.ne.s32.totalorder %s228, %s242
      %p244 = scmp.eq.s32.totalorder %s29, 0
      %p245 = por %p243, %p244
      %s247 = sadd.s32 %s246, 1
      %p250 = scmp.eq.s32.totalorder %s23, 5
      %p251 = scmp.ne.s32.totalorder %s246, %s248
      %p252 = scmp.eq.s32.totalorder %s23, 0
      %p253 = por %p251, %p252
      %p254 = scmp.ne.s32.totalorder %s246, %s248
      %p255 = scmp.eq.s32.totalorder %s28, 5
      %p256 = por %p254, %p255
      %p257 = scmp.ne.s32.totalorder %s248, %s249
      %p258 = scmp.eq.s32.totalorder %s28, 0
      %p259 = por %p257, %p258
      %p260 = scmp.ne.s32.totalorder %s248, %s249
      %p261 = scmp.eq.s32.totalorder %s29, 5
      %p262 = por %p260, %p261
      %p264 = scmp.ne.s32.totalorder %s249, %s263
      %p265 = scmp.eq.s32.totalorder %s29, 0
      %p266 = por %p264, %p265
      %s268 = sadd.s32 %s267, 1
      %p271 = scmp.eq.s32.totalorder %s23, 5
      %p272 = scmp.ne.s32.totalorder %s267, %s269
      %p273 = scmp.eq.s32.totalorder %s23, 0
      %p274 = por %p272, %p273
      %p275 = scmp.ne.s32.totalorder %s267, %s269
      %p276 = scmp.eq.s32.totalorder %s28, 5
      %p277 = por %p275, %p276
      %p278 = scmp.ne.s32.totalorder %s269, %s270
      %p279 = scmp.eq.s32.totalorder %s28, 0
      %p280 = por %p278, %p279
      %p281 = scmp.ne.s32.totalorder %s269, %s270
      %p282 = scmp.eq.s32.totalorder %s29, 5
      %p283 = por %p281, %p282
      %p285 = scmp.ne.s32.totalorder %s270, %s284
      %p286 = scmp.eq.s32.totalorder %s29, 0
      %p287 = por %p285, %p286
      %s288 = ssub.s32 %s23, %s30
      %p289 = scmp.eq.s32.totalorder %s288, 0
      %s291 = sadd.s32 %s290, 1
      %s292 = scalar_select %p289, %s290, %s291
      %p295 = pneg %p289
      %p296 = scmp.eq.s32.totalorder %s23, 5
      %p297 = por %p295, %p296
      %p298 = scmp.ne.s32.totalorder %s290, %s293
      %p299 = scmp.eq.s32.totalorder %s23, 0
      %p300 = por %p298, %p299
      %p301 = scmp.ne.s32.totalorder %s290, %s293
      %p302 = scmp.eq.s32.totalorder %s28, 5
      %p303 = por %p301, %p302
      %p304 = scmp.ne.s32.totalorder %s293, %s294
      %p305 = scmp.eq.s32.totalorder %s28, 0
      %p306 = por %p304, %p305
      %p307 = scmp.ne.s32.totalorder %s293, %s294
      %p308 = scmp.eq.s32.totalorder %s29, 5
      %p309 = por %p307, %p308
      %p311 = scmp.ne.s32.totalorder %s294, %s310
      %p312 = scmp.eq.s32.totalorder %s29, 0
      %p313 = por %p311, %p312
      %p314 = scmp.le.s32.totalorder 1, %s23
      %p315 = scmp.lt.s32.totalorder %s23, 7
      %p316 = pnand %p314, %p315
      %p317 = pneg %p316
      // Predicated region
      $region9: #{dynamics_rollout.1} parent=5 // pred_check
        _
      $region10: #{dynamics_rollout.1} parent=5 // pred_check_branch
        %319 = sbr.rel (%p316) target = $region12
      $region11: #{dynamics_rollout.1} parent=5 // pred_region
        %s320 = ssub.s32 %s23, 1
        // Predicated region
        $region13: #{dynamics_rollout.1} parent=11 // pred_check
          %p321 = pneg %p44
        $region14: #{dynamics_rollout.1} parent=11 // pred_check_branch
          %323 = sbr.rel (%p321) target = $region16
        $region15: #{dynamics_rollout.1} parent=11 // pred_region
          _
        $region16: #{dynamics_rollout.1} parent=11 // pred_fallthru
          _
        // Predicated region
        $region17: #{dynamics_rollout.1} parent=11 // pred_check
          %p324 = pneg %p91
        $region18: #{dynamics_rollout.1} parent=11 // pred_check_branch
          %326 = sbr.rel (%p324) target = $region20
        $region19: #{dynamics_rollout.1} parent=11 // pred_region
          %328 = vsyncadd [#allocation3], 0
          %s329 = sshll.u32 %s2, 4
          %s330 = int_to_ptr.hbm [resolvable:$true] %s329
          %s331 = sshll.u32 [#allocation2], 4
          %s332 = int_to_ptr.vmem [resolvable:$true] %s331
          %337 = dma.hbm_to_vmem [thread:$0]  %s330, 2048, %s332, [#allocation3], 128, 128, 8
        $region20: #{dynamics_rollout.1} parent=11 // pred_fallthru
          _
        // Predicated region
        $region21: #{dynamics_rollout.1} parent=11 // pred_check
          %p338 = pneg %p112
        $region22: #{dynamics_rollout.1} parent=11 // pred_check_branch
          %340 = sbr.rel (%p338) target = $region24
        $region23: #{dynamics_rollout.1} parent=11 // pred_region
          _
        $region24: #{dynamics_rollout.1} parent=11 // pred_fallthru
          _
        // Predicated region
        $region25: #{dynamics_rollout.1} parent=11 // pred_check
          %p341 = pneg %p133
        $region26: #{dynamics_rollout.1} parent=11 // pred_check_branch
          %343 = sbr.rel (%p341) target = $region28
        $region27: #{dynamics_rollout.1} parent=11 // pred_region
          _
        $region28: #{dynamics_rollout.1} parent=11 // pred_fallthru
          _
        // Predicated region
        $region29: #{dynamics_rollout.1} parent=11 // pred_check
          %p344 = pneg %p154
        $region30: #{dynamics_rollout.1} parent=11 // pred_check_branch
          %346 = sbr.rel (%p344) target = $region32
        $region31: #{dynamics_rollout.1} parent=11 // pred_region
          %348 = vsyncadd [#allocation6], 0
          %s349 = sshll.u32 %s5, 4
          %s350 = int_to_ptr.hbm [resolvable:$true] %s349
          %s351 = sshll.u32 [#allocation5], 4
          %s352 = int_to_ptr.vmem [resolvable:$true] %s351
          %357 = dma.hbm_to_vmem [thread:$0]  %s350, 2048, %s352, [#allocation6], 128, 128, 8
        $region32: #{dynamics_rollout.1} parent=11 // pred_fallthru
          _
        // Predicated region
        $region33: #{dynamics_rollout.1} parent=11 // pred_check
          %p358 = pneg %p175
        $region34: #{dynamics_rollout.1} parent=11 // pred_check_branch
          %360 = sbr.rel (%p358) target = $region36
        $region35: #{dynamics_rollout.1} parent=11 // pred_region
          _
        $region36: #{dynamics_rollout.1} parent=11 // pred_fallthru
          _
        // Predicated region
        $region37: #{dynamics_rollout.1} parent=11 // pred_check
          %p361 = pneg %p196
        $region38: #{dynamics_rollout.1} parent=11 // pred_check_branch
          %363 = sbr.rel (%p361) target = $region40
        $region39: #{dynamics_rollout.1} parent=11 // pred_region
          %365 = vsyncadd [#allocation6], 0
          %s366 = sshll.u32 %s7, 4
          %s367 = int_to_ptr.hbm [resolvable:$true] %s366
          %s368 = sshll.u32 [#allocation7], 4
          %s369 = int_to_ptr.vmem [resolvable:$true] %s368
          %374 = dma.hbm_to_vmem [thread:$0]  %s367, 2048, %s369, [#allocation6], 128, 128, 8
        $region40: #{dynamics_rollout.1} parent=11 // pred_fallthru
          _
        // Predicated region
        $region41: #{dynamics_rollout.1} parent=11 // pred_check
          %p375 = pneg %p217
        $region42: #{dynamics_rollout.1} parent=11 // pred_check_branch
          %377 = sbr.rel (%p375) target = $region44
        $region43: #{dynamics_rollout.1} parent=11 // pred_region
          _
        $region44: #{dynamics_rollout.1} parent=11 // pred_fallthru
          _
        // Predicated region
        $region45: #{dynamics_rollout.1} parent=11 // pred_check
          %p378 = pneg %p238
        $region46: #{dynamics_rollout.1} parent=11 // pred_check_branch
          %380 = sbr.rel (%p378) target = $region48
        $region47: #{dynamics_rollout.1} parent=11 // pred_region
          %382 = vsyncadd [#allocation9], 0
          %s383 = sshll.u32 %s9, 4
          %s384 = int_to_ptr.hbm [resolvable:$true] %s383
          %s385 = sshll.u32 [#allocation8], 4
          %s386 = int_to_ptr.vmem [resolvable:$true] %s385
          %391 = dma.hbm_to_vmem [thread:$0]  %s384, 2048, %s386, [#allocation9], 128, 128, 8
        $region48: #{dynamics_rollout.1} parent=11 // pred_fallthru
          _
        // Predicated region
        $region49: #{dynamics_rollout.1} parent=11 // pred_check
          %p392 = pneg %p259
        $region50: #{dynamics_rollout.1} parent=11 // pred_check_branch
          %394 = sbr.rel (%p392) target = $region52
        $region51: #{dynamics_rollout.1} parent=11 // pred_region
          _
        $region52: #{dynamics_rollout.1} parent=11 // pred_fallthru
          _
      $region12: #{dynamics_rollout.1} parent=5 // pred_fallthru
        _
      %p395 = scmp.lt.s32.totalorder %s23, 6
      // Predicated region
      $region53: #{dynamics_rollout.1} parent=5 // pred_check
        %p396 = pneg %p395
      $region54: #{dynamics_rollout.1} parent=5 // pred_check_branch
        %398 = sbr.rel (%p396) target = $region56
      $region55: #{dynamics_rollout.1} parent=5 // pred_region
        // Predicated region
        $region57: #{dynamics_rollout.1} parent=55 // pred_check
          %p399 = pneg %p64
        $region58: #{dynamics_rollout.1} parent=55 // pred_check_branch
          %401 = sbr.rel (%p399) target = $region60
        $region59: #{dynamics_rollout.1} parent=55 // pred_region
          %p402 = scmp.lt.s32.totalorder %s23, 5
          %s403 = scalar_select %p402, %s23, 5
          %s404 = smul.addr %s403, 8
          %s405 = scalar_lea.vmem %s1, %s404
        $region60: #{dynamics_rollout.1} parent=55 // pred_fallthru
          _
      $region56: #{dynamics_rollout.1} parent=5 // pred_fallthru
        _
      %p406 = scmp.le.s32.totalorder 1, %s23
      %p407 = scmp.lt.s32.totalorder %s23, 7
      %p408 = pnand %p406, %p407
      %p409 = pneg %p408
      // Predicated region
      $region61: #{dynamics_rollout.1} parent=5 // pred_check
        _
      $region62: #{dynamics_rollout.1} parent=5 // pred_check_branch
        %411 = sbr.rel (%p408) target = $region64
      $region63: #{dynamics_rollout.1} parent=5 // pred_region
        %s412 = ssub.s32 %s23, 1
        // Predicated region
        $region65: #{dynamics_rollout.1} parent=63 // pred_check
          %p413 = pneg %p91
        $region66: #{dynamics_rollout.1} parent=63 // pred_check_branch
          %415 = sbr.rel (%p413) target = $region68
        $region67: #{dynamics_rollout.1} parent=63 // pred_region
          %417 = dma.done [#allocation3], 2048
        $region68: #{dynamics_rollout.1} parent=63 // pred_fallthru
          _
        // Predicated region
        $region69: #{dynamics_rollout.1} parent=63 // pred_check
          %p418 = pneg %p154
        $region70: #{dynamics_rollout.1} parent=63 // pred_check_branch
          %420 = sbr.rel (%p418) target = $region72
        $region71: #{dynamics_rollout.1} parent=63 // pred_region
          %422 = dma.done [#allocation6], 2048
        $region72: #{dynamics_rollout.1} parent=63 // pred_fallthru
          _
        // Predicated region
        $region73: #{dynamics_rollout.1} parent=63 // pred_check
          %p423 = pneg %p196
        $region74: #{dynamics_rollout.1} parent=63 // pred_check_branch
          %425 = sbr.rel (%p423) target = $region76
        $region75: #{dynamics_rollout.1} parent=63 // pred_region
          %427 = dma.done [#allocation6], 2048
        $region76: #{dynamics_rollout.1} parent=63 // pred_fallthru
          _
        // Predicated region
        $region77: #{dynamics_rollout.1} parent=63 // pred_check
          %p428 = pneg %p238
        $region78: #{dynamics_rollout.1} parent=63 // pred_check_branch
          %430 = sbr.rel (%p428) target = $region80
        $region79: #{dynamics_rollout.1} parent=63 // pred_region
          %432 = dma.done [#allocation9], 2048
        $region80: #{dynamics_rollout.1} parent=63 // pred_fallthru
          _
        %p433 = pneg %p44
        %p434 = pneg %p41
        %p435 = scmp.lt.s32.totalorder %s28, 5
        %s436 = scalar_select %p435, %s28, 5
        %s437 = smul.addr %s436, 8
        %s438 = scalar_lea.vmem %s1, %s437
        %p439 = pneg %p70
        %p440 = pneg %p67
        %p441 = pneg %p91
        %p442 = pneg %p88
        %p443 = pneg %p112
        %p444 = pneg %p109
        %p445 = pneg %p133
        %p446 = pneg %p130
        %p447 = pneg %p154
        %p448 = pneg %p151
        %p449 = pneg %p175
        %p450 = pneg %p172
        %p451 = pneg %p196
        %p452 = pneg %p193
        %p453 = pneg %p217
        %p454 = pneg %p214
        %p455 = pneg %p238
        %p456 = pneg %p235
        %p457 = pneg %p259
        %p458 = pneg %p256
        %p459 = pneg %p280
        %p460 = pneg %p277
        %p461 = pneg %p306
        %p462 = pneg %p303
        %p463 = scmp.lt.s32.totalorder %s28, 5
        %s464 = scalar_select %p463, %s28, 5
        %s465 = smul.addr %s464, 8
        %s466 = scalar_lea.vmem %s12, %s465
        %p467 = scmp.lt.s32.totalorder %s28, 5
        %s468 = scalar_select %p467, %s28, 5
        %s469 = smul.addr %s468, 8
        %s470 = scalar_lea.vmem %s1, %s469
        %p471 = scmp.lt.s32.totalorder %s28, 5
        %s472 = scalar_select %p471, %s28, 5
        %s473 = smul.addr %s472, 8
        %s474 = scalar_lea.vmem %s12, %s473
        %p475 = scmp.eq.s32.totalorder %s28, 0
        // Predicated region
        $region81: #{dynamics_rollout.1} parent=63 // pred_check
          %p476 = pneg %p475
        $region82: #{dynamics_rollout.1} parent=63 // pred_check_branch
          %478 = sbr.rel (%p476) target = $region84
        $region83: #{dynamics_rollout.1} parent=63 // pred_region
          %v479 = vld [vmem:[%s0] sm:$0xff]
          %480 = vst [vmem:[#allocation10] sm:$0xff] %v479
        $region84: #{dynamics_rollout.1} parent=63 // pred_fallthru
          _
        %v481 = vld [vmem:[#allocation10] sm:$0xff]
        %v482 = vld [vmem:[%s470] sm:$0xff]
        %v483 = vld [vmem:[#allocation2] sm:$0xff]
        %v484 = vld [vmem:[#allocation2 + $0x8] sm:$0xff]
        %v485 = vld [vmem:[#allocation2 + $0x10] sm:$0xff]
        %v486 = vld [vmem:[#allocation2 + $0x18] sm:$0xff]
        %v487 = vld [vmem:[#allocation2 + $0x20] sm:$0xff]
        %v488 = vld [vmem:[#allocation2 + $0x28] sm:$0xff]
        %v489 = vld [vmem:[#allocation2 + $0x30] sm:$0xff]
        %v490 = vld [vmem:[#allocation2 + $0x38] sm:$0xff]
        %v491 = vld [vmem:[#allocation2 + $0x40] sm:$0xff]
        %v492 = vld [vmem:[#allocation2 + $0x48] sm:$0xff]
        %v493 = vld [vmem:[#allocation2 + $0x50] sm:$0xff]
        %v494 = vld [vmem:[#allocation2 + $0x58] sm:$0xff]
        %v495 = vld [vmem:[#allocation2 + $0x60] sm:$0xff]
        %v496 = vld [vmem:[#allocation2 + $0x68] sm:$0xff]
        %v497 = vld [vmem:[#allocation2 + $0x70] sm:$0xff]
        %v498 = vld [vmem:[#allocation2 + $0x78] sm:$0xff]
        %v499 = vld [vmem:[%s3] sm:$0xf]
        %vm500 = vcmask 31744
        %v502 = vsel %vm500, %v482, 0
        %vm504 = vcmask 1043456
        %v506 = vsel %vm504, %v499, 0
        %508 = vmatpush.msra.mxu0 0.0
        %509 = vmatpush.msra.mxu0 0.0
        %510 = vmatpush.msra.mxu0 0.0
        %511 = vmatpush.msra.mxu0 0.0
        %512 = vmatpush.msra.mxu0 0.0
        %513 = vmatpush.msra.mxu0 0.0
        %514 = vmatpush.msra.mxu0 0.0
        %515 = vmatpush.msra.mxu0 0.0
        %516 = vmatpush.msra.mxu0 0.0
        %517 = vmatpush.msra.mxu0 0.0
        %518 = vmatpush.msra.mxu0 0.0
        %519 = vmatpush.msra.mxu0 0.0
        %520 = vmatpush.msra.mxu0 0.0
        %521 = vmatpush.msra.mxu0 0.0
        %522 = vmatpush.msra.mxu0 0.0
        %523 = vmatpush.msra.mxu0 %v506
        %524 = vmatmul.f32.gmra.mxu0 %v502
        %v525 = vpop.f32.mrf.mxu0
        %v526 = vadd.f32 0.0, %v525
        %527 = vdwg.mxu0
        %528 = vmatpush.msra.mxu0 %v498
        %529 = vmatpush.msra.mxu0 %v497
        %530 = vmatpush.msra.mxu0 %v496
        %531 = vmatpush.msra.mxu0 %v495
        %532 = vmatpush.msra.mxu0 %v494
        %533 = vmatpush.msra.mxu0 %v493
        %534 = vmatpush.msra.mxu0 %v492
        %535 = vmatpush.msra.mxu0 %v491
        %536 = vmatpush.msra.mxu0 %v490
        %537 = vmatpush.msra.mxu0 %v489
        %538 = vmatpush.msra.mxu0 %v488
        %539 = vmatpush.msra.mxu0 %v487
        %540 = vmatpush.msra.mxu0 %v486
        %541 = vmatpush.msra.mxu0 %v485
        %542 = vmatpush.msra.mxu0 %v484
        %543 = vmatpush.msra.mxu0 %v483
        %544 = vmatmul.f32.gmra.mxu0 %v481
        %v545 = vpop.f32.mrf.mxu0
        %v546 = vadd.f32 %v526, %v545
        %547 = vdwg.mxu0
        %v548 = vld [vmem:[%s4] sm:$0x1]
        %v550 = vperm.slane %v548, 0
        %v552 = vadd.f32 %v546, %v550
        %v553 = vmax.f32 %v552, 0.0
        %v554 = vld [vmem:[#allocation5] sm:$0xff]
        %v555 = vld [vmem:[#allocation5 + $0x8] sm:$0xff]
        %v556 = vld [vmem:[#allocation5 + $0x10] sm:$0xff]
        %v557 = vld [vmem:[#allocation5 + $0x18] sm:$0xff]
        %v558 = vld [vmem:[#allocation5 + $0x20] sm:$0xff]
        %v559 = vld [vmem:[#allocation5 + $0x28] sm:$0xff]
        %v560 = vld [vmem:[#allocation5 + $0x30] sm:$0xff]
        %v561 = vld [vmem:[#allocation5 + $0x38] sm:$0xff]
        %v562 = vld [vmem:[#allocation5 + $0x40] sm:$0xff]
        %v563 = vld [vmem:[#allocation5 + $0x48] sm:$0xff]
        %v564 = vld [vmem:[#allocation5 + $0x50] sm:$0xff]
        %v565 = vld [vmem:[#allocation5 + $0x58] sm:$0xff]
        %v566 = vld [vmem:[#allocation5 + $0x60] sm:$0xff]
        %v567 = vld [vmem:[#allocation5 + $0x68] sm:$0xff]
        %v568 = vld [vmem:[#allocation5 + $0x70] sm:$0xff]
        %v569 = vld [vmem:[#allocation5 + $0x78] sm:$0xff]
        %v570 = vld [vmem:[%s6] sm:$0x1]
        %v572 = vperm.slane %v570, 0
        %574 = vmatpush.msra.mxu0 %v569
        %575 = vmatpush.msra.mxu0 %v568
        %576 = vmatpush.msra.mxu0 %v567
        %577 = vmatpush.msra.mxu0 %v566
        %578 = vmatpush.msra.mxu0 %v565
        %579 = vmatpush.msra.mxu0 %v564
        %580 = vmatpush.msra.mxu0 %v563
        %581 = vmatpush.msra.mxu0 %v562
        %582 = vmatpush.msra.mxu0 %v561
        %583 = vmatpush.msra.mxu0 %v560
        %584 = vmatpush.msra.mxu0 %v559
        %585 = vmatpush.msra.mxu0 %v558
        %586 = vmatpush.msra.mxu0 %v557
        %587 = vmatpush.msra.mxu0 %v556
        %588 = vmatpush.msra.mxu0 %v555
        %589 = vmatpush.msra.mxu0 %v554
        %590 = vmatmul.f32.gmra.mxu0 %v553
        %v591 = vpop.f32.mrf.mxu0
        %v592 = vadd.f32 %v572, %v591
        %593 = vdwg.mxu0
        %v594 = vmax.f32 %v592, 0.0
        %v595 = vld [vmem:[#allocation7] sm:$0xff]
        %v596 = vld [vmem:[#allocation7 + $0x8] sm:$0xff]
        %v597 = vld [vmem:[#allocation7 + $0x10] sm:$0xff]
        %v598 = vld [vmem:[#allocation7 + $0x18] sm:$0xff]
        %v599 = vld [vmem:[#allocation7 + $0x20] sm:$0xff]
        %v600 = vld [vmem:[#allocation7 + $0x28] sm:$0xff]
        %v601 = vld [vmem:[#allocation7 + $0x30] sm:$0xff]
        %v602 = vld [vmem:[#allocation7 + $0x38] sm:$0xff]
        %v603 = vld [vmem:[#allocation7 + $0x40] sm:$0xff]
        %v604 = vld [vmem:[#allocation7 + $0x48] sm:$0xff]
        %v605 = vld [vmem:[#allocation7 + $0x50] sm:$0xff]
        %v606 = vld [vmem:[#allocation7 + $0x58] sm:$0xff]
        %v607 = vld [vmem:[#allocation7 + $0x60] sm:$0xff]
        %v608 = vld [vmem:[#allocation7 + $0x68] sm:$0xff]
        %v609 = vld [vmem:[#allocation7 + $0x70] sm:$0xff]
        %v610 = vld [vmem:[#allocation7 + $0x78] sm:$0xff]
        %v611 = vld [vmem:[%s8] sm:$0x1]
        %v613 = vperm.slane %v611, 0
        %615 = vmatpush.msra.mxu0 %v610
        %616 = vmatpush.msra.mxu0 %v609
        %617 = vmatpush.msra.mxu0 %v608
        %618 = vmatpush.msra.mxu0 %v607
        %619 = vmatpush.msra.mxu0 %v606
        %620 = vmatpush.msra.mxu0 %v605
        %621 = vmatpush.msra.mxu0 %v604
        %622 = vmatpush.msra.mxu0 %v603
        %623 = vmatpush.msra.mxu0 %v602
        %624 = vmatpush.msra.mxu0 %v601
        %625 = vmatpush.msra.mxu0 %v600
        %626 = vmatpush.msra.mxu0 %v599
        %627 = vmatpush.msra.mxu0 %v598
        %628 = vmatpush.msra.mxu0 %v597
        %629 = vmatpush.msra.mxu0 %v596
        %630 = vmatpush.msra.mxu0 %v595
        %631 = vmatmul.f32.gmra.mxu0 %v594
        %v632 = vpop.f32.mrf.mxu0
        %v633 = vadd.f32 %v613, %v632
        %634 = vdwg.mxu0
        %v635 = vmax.f32 %v633, 0.0
        %636 = vst [vmem:[#allocation10] sm:$0xff] %v635
        %v637 = vld [vmem:[#allocation8] sm:$0xff]
        %v638 = vld [vmem:[#allocation8 + $0x8] sm:$0xff]
        %v639 = vld [vmem:[#allocation8 + $0x10] sm:$0xff]
        %v640 = vld [vmem:[#allocation8 + $0x18] sm:$0xff]
        %v641 = vld [vmem:[#allocation8 + $0x20] sm:$0xff]
        %v642 = vld [vmem:[#allocation8 + $0x28] sm:$0xff]
        %v643 = vld [vmem:[#allocation8 + $0x30] sm:$0xff]
        %v644 = vld [vmem:[#allocation8 + $0x38] sm:$0xff]
        %v645 = vld [vmem:[#allocation8 + $0x40] sm:$0xff]
        %v646 = vld [vmem:[#allocation8 + $0x48] sm:$0xff]
        %v647 = vld [vmem:[#allocation8 + $0x50] sm:$0xff]
        %v648 = vld [vmem:[#allocation8 + $0x58] sm:$0xff]
        %v649 = vld [vmem:[#allocation8 + $0x60] sm:$0xff]
        %v650 = vld [vmem:[#allocation8 + $0x68] sm:$0xff]
        %v651 = vld [vmem:[#allocation8 + $0x70] sm:$0xff]
        %v652 = vld [vmem:[#allocation8 + $0x78] sm:$0xff]
        %v653 = vld [vmem:[%s10] sm:$0x1]
        %v655 = vperm.slane %v653, 0
        %657 = vmatpush.msra.mxu0 %v652
        %658 = vmatpush.msra.mxu0 %v651
        %659 = vmatpush.msra.mxu0 %v650
        %660 = vmatpush.msra.mxu0 %v649
        %661 = vmatpush.msra.mxu0 %v648
        %662 = vmatpush.msra.mxu0 %v647
        %663 = vmatpush.msra.mxu0 %v646
        %664 = vmatpush.msra.mxu0 %v645
        %665 = vmatpush.msra.mxu0 %v644
        %666 = vmatpush.msra.mxu0 %v643
        %667 = vmatpush.msra.mxu0 %v642
        %668 = vmatpush.msra.mxu0 %v641
        %669 = vmatpush.msra.mxu0 %v640
        %670 = vmatpush.msra.mxu0 %v639
        %671 = vmatpush.msra.mxu0 %v638
        %672 = vmatpush.msra.mxu0 %v637
        %673 = vmatmul.f32.gmra.mxu0 %v635
        %v674 = vpop.f32.mrf.mxu0
        %v675 = vadd.f32 %v655, %v674
        %676 = vdwg.mxu0
        %677 = vst [vmem:[%s474] sm:$0xff] %v675
        %p678 = scmp.lt.s32.totalorder %s28, 5
        %s679 = scalar_select %p678, %s28, 5
        %s680 = smul.addr %s679, 8
        %s681 = scalar_lea.vmem %s12, %s680
        // Predicated region
        $region85: #{dynamics_rollout.1} parent=63 // pred_check
          %p682 = pneg %p277
        $region86: #{dynamics_rollout.1} parent=63 // pred_check_branch
          %684 = sbr.rel (%p682) target = $region88
        $region87: #{dynamics_rollout.1} parent=63 // pred_region
          %686 = vsyncadd [#allocation4], 0
          %s688 = sshll.u32 [#allocation10], 4
          %s689 = int_to_ptr.vmem [resolvable:$true] %s688
          %s690 = sshll.u32 %s11, 4
          %s691 = int_to_ptr.hbm [resolvable:$true] %s690
          %693 = dma.vmem_to_hbm [thread:$0]  %s689, 128, %s691, [#allocation4]
        $region88: #{dynamics_rollout.1} parent=63 // pred_fallthru
          _
        // Predicated region
        $region89: #{dynamics_rollout.1} parent=63 // pred_check
          %p694 = pneg %p303
        $region90: #{dynamics_rollout.1} parent=63 // pred_check_branch
          %696 = sbr.rel (%p694) target = $region92
        $region91: #{dynamics_rollout.1} parent=63 // pred_region
          _
        $region92: #{dynamics_rollout.1} parent=63 // pred_fallthru
          _
        // Predicated region
        $region93: #{dynamics_rollout.1} parent=63 // pred_check
          %p697 = pneg %p277
        $region94: #{dynamics_rollout.1} parent=63 // pred_check_branch
          %699 = sbr.rel (%p697) target = $region96
        $region95: #{dynamics_rollout.1} parent=63 // pred_region
          %701 = dma.done [#allocation4], 128
        $region96: #{dynamics_rollout.1} parent=63 // pred_fallthru
          _
      $region64: #{dynamics_rollout.1} parent=5 // pred_fallthru
        _
      %p702 = scmp.le.s32.totalorder 2, %s23
      // Predicated region
      $region97: #{dynamics_rollout.1} parent=5 // pred_check
        %p703 = pneg %p702
      $region98: #{dynamics_rollout.1} parent=5 // pred_check_branch
        %705 = sbr.rel (%p703) target = $region100
      $region99: #{dynamics_rollout.1} parent=5 // pred_region
        %s706 = ssub.s32 %s23, 2
        // Predicated region
        $region101: #{dynamics_rollout.1} parent=99 // pred_check
          %p707 = pneg %p309
        $region102: #{dynamics_rollout.1} parent=99 // pred_check_branch
          %709 = sbr.rel (%p707) target = $region104
        $region103: #{dynamics_rollout.1} parent=99 // pred_region
          %p710 = scmp.lt.s32.totalorder %s29, 5
          %s711 = scalar_select %p710, %s29, 5
          %s712 = smul.addr %s711, 8
          %s713 = scalar_lea.vmem %s12, %s712
        $region104: #{dynamics_rollout.1} parent=99 // pred_fallthru
          _
      $region100: #{dynamics_rollout.1} parent=5 // pred_fallthru
        _
    $region6: #{dynamics_rollout.1} parent=1 // loop_footer
      %s27 = sadd.s32 1, %s23
    $region7: #{dynamics_rollout.1} parent=1 // loop_footer_branch
      %22 = sbr.rel target = $region3
    $region8: #{dynamics_rollout.1} parent=1 // loop_exit
      _
    %714 = vsyncpa [#allocation3], 1
    %s715 = scalar_lea.sflag [#allocation3], 1
    %716 = vsyncpa %s715, 1
    %717 = vsyncpa [#allocation6], 1
    %718 = vsyncpa [#allocation9], 1
    %719 = vsyncpa [#allocation4], 1
    %s720 = scalar_lea.sflag [#allocation4], 1
    %721 = vsyncpa %s720, 1

</llo_original>
